<compile_context>
chip_gen: v7x
topology: tpu7x:2x2x1
jax: 0.10.0
libtpu: 0.0.40
codegen_flags: <defaults>
</compile_context>

<pallas_src>
import functools
import math

import jax
import jax.numpy as jnp
from jax.experimental import pallas as pl
from jax.experimental.pallas import tpu as pltpu

LN_EPS = 1e-5            # torch.nn.LayerNorm default
_LANE = 128
_SUBLANE = 8
_DEFAULT_ROW_TILE = 256  # big row tiles -> few grid steps, full MXU rows
_VMEM_LIMIT = 48 * 1024 * 1024  # above 32MiB scoped default, safe on v7x 64MiB


def _round_up(x, m):
    return (x + m - 1) // m * m


# ---------------------------------------------------------------------------
# Fused  rows @ W + bias  (+ residual)  (+ LayerNorm)  kernel
# ---------------------------------------------------------------------------
def _fused_linear_kernel(*refs, c_out, do_residual, do_ln):
    if do_residual:
        x_ref, r_ref, w_ref, p_ref, o_ref = refs
    else:
        x_ref, w_ref, p_ref, o_ref = refs
        r_ref = None

    # MXU matmul directly on input dtype, f32 accumulation.
    y = jnp.dot(x_ref[...], w_ref[...], preferred_element_type=jnp.float32)

    params = p_ref[...].astype(jnp.float32)        # (8, C2p) tiny slab
    y = y + params[0:1, :]                         # bias
    if do_residual:
        y = y + r_ref[...].astype(jnp.float32)

    if do_ln:
        # One-pass stats over the real (unpadded) feature count c_out.
        # Padded lanes of y are exactly zero (zero-padded W/bias/residual),
        # so they contribute nothing to the sums.
        inv_c = 1.0 / c_out
        s1 = jnp.sum(y, axis=-1, keepdims=True)
        s2 = jnp.sum(y * y, axis=-1, keepdims=True)
        mean = s1 * inv_c
        var = jnp.maximum(s2 * inv_c - mean * mean, 0.0)
        inv = jax.lax.rsqrt(var + LN_EPS)
        y = (y - mean) * inv * params[1:2, :] + params[2:3, :]

    # TODO(synk): training-mode dropout (pltpu.prng_random_bits mask) not
    # emitted; nn.Dropout is identity in eval mode.
    o_ref[...] = y.astype(o_ref.dtype)


def _fused_linear(x, w_t, params3, residual=None, *, do_ln,
                  row_tile=_DEFAULT_ROW_TILE):
    """y = x @ w_t + bias (+ residual) (+ LayerNorm over last dim).

    x: [N, C1]; w_t: [C1, C2] (already transposed); params3: [3, C2] rows
    (bias, gamma, beta).  Returns [N, C2] in x.dtype.
    """
    N, C1 = x.shape
    C2 = w_t.shape[1]

    c1p = _round_up(C1, _LANE)
    c2p = _round_up(C2, _LANE)                 # lane-dense output tiles
    tile = min(row_tile, _round_up(N, _SUBLANE))
    n_p = _round_up(N, tile)

    xp = jnp.pad(x, ((0, n_p - N), (0, c1p - C1)))
    wp = jnp.pad(w_t, ((0, c1p - C1), (0, c2p - C2)))
    pp = jnp.pad(params3, ((0, 8 - params3.shape[0]), (0, c2p - C2)))

    operands = [xp]
    in_specs = [pl.BlockSpec((tile, c1p), lambda i: (i, 0))]
    if residual is not None:
        rp = jnp.pad(residual, ((0, n_p - N), (0, c2p - C2)))
        operands.append(rp)
        in_specs.append(pl.BlockSpec((tile, c2p), lambda i: (i, 0)))
    operands += [wp, pp]
    in_specs += [
        pl.BlockSpec((c1p, c2p), lambda i: (0, 0)),   # weight (resident)
        pl.BlockSpec((8, c2p), lambda i: (0, 0)),     # packed bias/gamma/beta
    ]

    kernel = functools.partial(
        _fused_linear_kernel,
        c_out=float(C2),
        do_residual=residual is not None,
        do_ln=do_ln,
    )

    # TODO(synk): if C1*C2 weights exceed ~12-16 MiB, tile C1 as an
    # 'arbitrary' grid axis with an f32 accumulator instead of keeping the
    # full weight resident (needed for v7x's 64 MiB VMEM).
    out = pl.pallas_call(
        kernel,
        out_shape=jax.ShapeDtypeStruct((n_p, c2p), x.dtype),
        grid_spec=pltpu.PrefetchScalarGridSpec(
            num_scalar_prefetch=0,
            grid=(n_p // tile,),
            in_specs=in_specs,
            out_specs=pl.BlockSpec((tile, c2p), lambda i: (i, 0)),
        ),
        compiler_params=pltpu.CompilerParams(
            dimension_semantics=("parallel",),
            vmem_limit_bytes=_VMEM_LIMIT,
        ),
    )(*operands)
    return out[:N, :C2]


# ---------------------------------------------------------------------------
# Softmax attention per (batch*head)
# ---------------------------------------------------------------------------
def _attention_kernel(q_ref, k_ref, v_ref, o_ref, *, scale):
    q = q_ref[...].astype(jnp.float32) * scale        # (1, Lq, Dh)
    k = k_ref[...].astype(jnp.float32)                # (1, Lk, Dh)
    v = v_ref[...].astype(jnp.float32)
    s = jnp.einsum('bqd,bkd->bqk', q, k, preferred_element_type=jnp.float32)
    s = s - jnp.max(s, axis=-1, keepdims=True)
    p = jnp.exp(s)
    p = p / jnp.sum(p, axis=-1, keepdims=True)
    o = jnp.einsum('bqk,bkd->bqd', p, v, preferred_element_type=jnp.float32)
    # TODO(synk): attn_mask / key_padding_mask not implemented (None in test).
    o_ref[...] = o.astype(o_ref.dtype)


def _mh_attention(qh, kh, vh):
    """qh: [BH, Lq, Dh]; kh, vh: [BH, Lk, Dh]  ->  [BH, Lq, Dh]."""
    BH, Lq, Dh = qh.shape
    Lk = kh.shape[1]
    kernel = functools.partial(_attention_kernel, scale=1.0 / math.sqrt(Dh))
    return pl.pallas_call(
        kernel,
        out_shape=jax.ShapeDtypeStruct((BH, Lq, Dh), qh.dtype),
        grid_spec=pltpu.PrefetchScalarGridSpec(
            num_scalar_prefetch=0,
            grid=(BH,),
            in_specs=[pl.BlockSpec((1, Lq, Dh), lambda i: (i, 0, 0)),
                      pl.BlockSpec((1, Lk, Dh), lambda i: (i, 0, 0)),
                      pl.BlockSpec((1, Lk, Dh), lambda i: (i, 0, 0))],
            out_specs=pl.BlockSpec((1, Lq, Dh), lambda i: (i, 0, 0)),
        ),
        compiler_params=pltpu.CompilerParams(
            dimension_semantics=("parallel",),
            vmem_limit_bytes=_VMEM_LIMIT,
        ),
    )(qh, kh, vh)


# ---------------------------------------------------------------------------
# Head split/merge (PyTorch nn.MultiheadAttention layout: [L, B, E])
# ---------------------------------------------------------------------------
def _split_heads(rows, t_len, batch, nhead, head_dim):
    x = rows.reshape(t_len, batch, nhead, head_dim)
    return x.transpose(1, 2, 0, 3).reshape(batch * nhead, t_len, head_dim)


def _merge_heads(x, t_len, batch, nhead, head_dim):
    x = x.reshape(batch, nhead, t_len, head_dim).transpose(2, 0, 1, 3)
    return x.reshape(t_len * batch, nhead * head_dim)


# ---------------------------------------------------------------------------
# Full layer forward (eval mode, no masks)
# ---------------------------------------------------------------------------
def transformer_res_layer(tgt, k_memory, v_memory, params, *, nhead):
    """tgt: [L, B, E]; k_memory, v_memory: [S, B, E]."""
    L, B, E = tgt.shape
    S = k_memory.shape[0]
    Dh = E // nhead

    tgt_rows = tgt.reshape(L * B, E)

    # ---- self-attention block --------------------------------------------
    qkv = _fused_linear(tgt_rows, params['sa_qkv_w'], params['sa_qkv_p'],
                        do_ln=False)                               # [L*B, 3E]
    q = _split_heads(qkv[:, :E], L, B, nhead, Dh)
    k = _split_heads(qkv[:, E:2 * E], L, B, nhead, Dh)
    v = _split_heads(qkv[:, 2 * E:], L, B, nhead, Dh)
    attn = _merge_heads(_mh_attention(q, k, v), L, B, nhead, Dh)
    # out-proj + residual + LayerNorm (norm1), fused in one kernel call
    x1 = _fused_linear(attn, params['sa_out_w'], params['sa_out_p'],
                       residual=tgt_rows, do_ln=True)              # [L*B, E]

    # ---- cross-attention block -------------------------------------------
    km_rows = k_memory.reshape(S * B, E)
    vm_rows = v_memory.reshape(S * B, E)
    q2 = _fused_linear(x1, params['ca_q_w'], params['ca_q_p'], do_ln=False)
    k2 = _fused_linear(km_rows, params['ca_k_w'], params['ca_k_p'], do_ln=False)
    v2 = _fused_linear(vm_rows, params['ca_v_w'], params['ca_v_p'], do_ln=False)
    q2 = _split_heads(q2, L, B, nhead, Dh)
    k2 = _split_heads(k2, S, B, nhead, Dh)
    v2 = _split_heads(v2, S, B, nhead, Dh)
    attn2 = _merge_heads(_mh_attention(q2, k2, v2), L, B, nhead, Dh)
    # out-proj + residual + LayerNorm (norm2), fused
    x2 = _fused_linear(attn2, params['ca_out_w'], params['ca_out_p'],
                       residual=x1, do_ln=True)                    # [L*B, E]

    return x2.reshape(L, B, E)


def prepare_params(raw):
    """One-time repack: transpose Linear weights to [in, out] and stack
    (bias, gamma, beta) into (3, C) parameter slabs per fused kernel call."""
    E = raw['sa_out_w'].shape[0]

    def pblock(bias, gamma=None, beta=None):
        gamma = jnp.zeros_like(bias) if gamma is None else gamma
        beta = jnp.zeros_like(bias) if beta is None else beta
        return jnp.stack([bias, gamma, beta])

    wq, wk, wv = raw['ca_in_w'][:E], raw['ca_in_w'][E:2 * E], raw['ca_in_w'][2 * E:]
    bq, bk, bv = raw['ca_in_b'][:E], raw['ca_in_b'][E:2 * E], raw['ca_in_b'][2 * E:]
    return {
        'sa_qkv_w': raw['sa_in_w'].T,
        'sa_qkv_p': pblock(raw['sa_in_b']),
        'sa_out_w': raw['sa_out_w'].T,
        'sa_out_p': pblock(raw['sa_out_b'], raw['norm1_g'], raw['norm1_b']),
        'ca_q_w': wq.T, 'ca_q_p': pblock(bq),
        'ca_k_w': wk.T, 'ca_k_p': pblock(bk),
        'ca_v_w': wv.T, 'ca_v_p': pblock(bv),
        'ca_out_w': raw['ca_out_w'].T,
        'ca_out_p': pblock(raw['ca_out_b'], raw['norm2_g'], raw['norm2_b']),
    }


# ---------------------------------------------------------------------------
# Pure-JAX reference (mirrors PyTorch eval-mode forward)
# ---------------------------------------------------------------------------
def _mha_ref(q_in, k_in, v_in, in_w, in_b, out_w, out_b, nhead):
    E = q_in.shape[-1]
    Dh = E // nhead
    wq, wk, wv = in_w[:E], in_w[E:2 * E], in_w[2 * E:]
    bq, bk, bv = in_b[:E], in_b[E:2 * E], in_b[2 * E:]
    q = jnp.einsum('lbe,fe->lbf', q_in, wq) + bq
    k = jnp.einsum('lbe,fe->lbf', k_in, wk) + bk
    v = jnp.einsum('lbe,fe->lbf', v_in, wv) + bv
    Lq, B, _ = q.shape
    Lk = k.shape[0]
    qh = q.reshape(Lq, B, nhead, Dh).transpose(1, 2, 0, 3)
    kh = k.reshape(Lk, B, nhead, Dh).transpose(1, 2, 0, 3)
    vh = v.reshape(Lk, B, nhead, Dh).transpose(1, 2, 0, 3)
    s = jnp.einsum('bhqd,bhkd->bhqk', qh, kh) / math.sqrt(Dh)
    p = jax.nn.softmax(s, axis=-1)
    o = jnp.einsum('bhqk,bhkd->bhqd', p, vh)
    o = o.transpose(2, 0, 1, 3).reshape(Lq, B, E)
    return jnp.einsum('lbe,fe->lbf', o, out_w) + out_b


def _layer_norm_ref(x, g, b):
    mean = jnp.mean(x, axis=-1, keepdims=True)
    var = jnp.mean((x - mean) ** 2, axis=-1, keepdims=True)
    return (x - mean) / jnp.sqrt(var + LN_EPS) * g + b


def _reference(tgt, k_memory, v_memory, raw, nhead):
    a = _mha_ref(tgt, tgt, tgt, raw['sa_in_w'], raw['sa_in_b'],
                 raw['sa_out_w'], raw['sa_out_b'], nhead)
    x = _layer_norm_ref(tgt + a, raw['norm1_g'], raw['norm1_b'])
    c = _mha_ref(x, k_memory, v_memory, raw['ca_in_w'], raw['ca_in_b'],
                 raw['ca_out_w'], raw['ca_out_b'], nhead)
    return _layer_norm_ref(x + c, raw['norm2_g'], raw['norm2_b'])


if __name__ == "__main__":
    key = jax.random.PRNGKey(0)
    L, S, B = 8, 16, 2          # tgt seq len, memory seq len, batch
    E, H = 32, 4                # d_model, nhead

    keys = jax.random.split(key, 15)

    def nrm(k, shape, scale=1.0):
        return scale * jax.random.normal(k, shape, dtype=jnp.float32)

    raw = {
        'sa_in_w': nrm(keys[0], (3 * E, E), 1.0 / math.sqrt(E)),
        'sa_in_b': nrm(keys[1], (3 * E,), 0.02),
        'sa_out_w': nrm(keys[2], (E, E), 1.0 / math.sqrt(E)),
        'sa_out_b': nrm(keys[3], (E,), 0.02),
        'ca_in_w': nrm(keys[4], (3 * E, E), 1.0 / math.sqrt(E)),
        'ca_in_b': nrm(keys[5], (3 * E,), 0.02),
        'ca_out_w': nrm(keys[6], (E, E), 1.0 / math.sqrt(E)),
        'ca_out_b': nrm(keys[7], (E,), 0.02),
        'norm1_g': 1.0 + 0.1 * jax.random.normal(keys[8], (E,), dtype=jnp.float32),
        'norm1_b': nrm(keys[9], (E,), 0.1),
        'norm2_g': 1.0 + 0.1 * jax.random.normal(keys[10], (E,), dtype=jnp.float32),
        'norm2_b': nrm(keys[11], (E,), 0.1),
    }
    tgt = nrm(keys[12], (L, B, E))
    k_memory = nrm(keys[13], (S, B, E))
    v_memory = nrm(keys[14], (S, B, E))

    params = prepare_params(raw)   # one-time transpose / packing
    out = transformer_res_layer(tgt, k_memory, v_memory, params, nhead=H)
    out = jax.block_until_ready(out)

    ref = _reference(tgt, k_memory, v_memory, raw, H)
    assert out.shape == (L, B, E)
    assert jnp.allclose(out, ref, atol=2e-3, rtol=2e-3), "mismatch vs reference"
    print("KERNEL_OK")
</pallas_src>

<mosaic_0001>
module attributes {stable_mosaic.version = 11 : i64} {
  func.func @_fused_linear_kernel(%arg0: i32, %arg1: memref<16x128xf32, #tpu.memory_space<vmem>>, %arg2: memref<128x128xf32, #tpu.memory_space<vmem>>, %arg3: memref<8x128xf32, #tpu.memory_space<vmem>>, %arg4: memref<16x128xf32, #tpu.memory_space<vmem>>) attributes {dimension_semantics = [#tpu.dimension_semantics<parallel>], iteration_bounds = array<i64: 1>, scalar_prefetch = 0 : i64, scratch_operands = 0 : i64, tpu.core_type = #tpu.core_type<tc>, window_params = [{transform_indices = @transform_0, window_bounds = array<i64: 16, 128>}, {pipeline_mode = #tpu.pipeline_mode<synchronous>, transform_indices = @transform_1, window_bounds = array<i64: 128, 128>}, {pipeline_mode = #tpu.pipeline_mode<synchronous>, transform_indices = @transform_2, window_bounds = array<i64: 8, 128>}, {transform_indices = @transform_3, window_bounds = array<i64: 16, 128>}]} {
    %c0 = arith.constant 0 : index
    %c0_0 = arith.constant 0 : index
    %0 = vector.load %arg1[%c0, %c0_0] : memref<16x128xf32, #tpu.memory_space<vmem>>, vector<16x128xf32>
    %c0_1 = arith.constant 0 : index
    %c0_2 = arith.constant 0 : index
    %1 = vector.load %arg2[%c0_1, %c0_2] : memref<128x128xf32, #tpu.memory_space<vmem>>, vector<128x128xf32>
    %cst = arith.constant dense<0.000000e+00> : vector<16x128xf32>
    %2 = tpu.matmul %0, %1, %cst {dimension_numbers = #tpu.dot_dimension_numbers<[1], [0], [0], [1], [0, 0, 1, 1], [], []>} : vector<16x128xf32>, vector<128x128xf32>, vector<16x128xf32> -> vector<16x128xf32>
    %c0_3 = arith.constant 0 : index
    %c0_4 = arith.constant 0 : index
    %3 = vector.load %arg3[%c0_3, %c0_4] : memref<8x128xf32, #tpu.memory_space<vmem>>, vector<8x128xf32>
    %4 = vector.extract_strided_slice %3 {offsets = [0, 0], sizes = [1, 128], strides = [1, 1]} : vector<8x128xf32> to vector<1x128xf32>
    %5 = vector.broadcast %4 : vector<1x128xf32> to vector<16x128xf32>
    %6 = arith.addf %2, %5 : vector<16x128xf32>
    %c0_5 = arith.constant 0 : index
    %c0_6 = arith.constant 0 : index
    %7 = vector.load %arg4[%c0_5, %c0_6] : memref<16x128xf32, #tpu.memory_space<vmem>>, vector<16x128xf32>
    tpu.vector_store %arg4[%c0_5, %c0_6], %6 {strides = array<i32>} : memref<16x128xf32, #tpu.memory_space<vmem>>, vector<16x128xf32>,
    return
  }
  func.func @transform_0(%arg0: i32) -> (i32, i32) {
    %c0_i32 = arith.constant 0 : i32
    %c0_i32_0 = arith.constant 0 : i32
    return %arg0, %c0_i32 : i32, i32
  }
  func.func @transform_1(%arg0: i32) -> (i32, i32) {
    %c0_i32 = arith.constant 0 : i32
    %c0_i32_0 = arith.constant 0 : i32
    %c0_i32_1 = arith.constant 0 : i32
    return %c0_i32, %c0_i32_0 : i32, i32
  }
  func.func @transform_2(%arg0: i32) -> (i32, i32) {
    %c0_i32 = arith.constant 0 : i32
    %c0_i32_0 = arith.constant 0 : i32
    %c0_i32_1 = arith.constant 0 : i32
    return %c0_i32, %c0_i32_0 : i32, i32
  }
  func.func @transform_3(%arg0: i32) -> (i32, i32) {
    %c0_i32 = arith.constant 0 : i32
    %c0_i32_0 = arith.constant 0 : i32
    return %arg0, %c0_i32 : i32, i32
  }
}

</mosaic_0001>

<llo_original>
// kernel: tpu_custom_call.1
$region0: #{tpu_custom_call.1}
  #allocation0 [shape = 'u32[]', space=smem, size = 0x4, offset = 0x4, fixed_abs, tag = 'smem constant byte address 0x4 - core index']
  #allocation1 [shape = 'u32[144,128]{1,0:T(1,128)}', space=vmem, size = 0x12000, scoped, tag = 'internal scratch']
  %s0 = inlined_call_operand.hbm [shape: f32[16,128], index: 0, kind: input, shape index: {}]
  %s1 = inlined_call_operand.hbm [shape: f32[128,128], index: 1, kind: input, shape index: {}]
  %s2 = inlined_call_operand.hbm [shape: f32[8,128], index: 2, kind: input, shape index: {}]
  %s3 = inlined_call_operand.hbm [shape: f32[16,128], index: 3, kind: output, shape index: {}]
  %s4 = sld [smem:[#allocation0]]
  $region34: #{tpu_custom_call.1} parent=0
    _
  %s6 = ssub.s32 1, %s4
  %s7 = scalar_select 0, %s6, %s4
  $region1: #{tpu_custom_call.1} parent=0
    #allocation2 [shape = 'u8[8192]{0}', space=vmem, size = 0x2000, scoped, tag = 'input window, operand 0, single buffered']
    #allocation3 [shape = 's32[1]{0}', space=sflag, size = 0x4, scoped, tag = 'scoped memory for tpu_custom_call.1']
    #allocation4 [shape = 's32[1]{0}', space=sflag, size = 0x4, scoped, tag = 'scoped memory for tpu_custom_call.1']
    #allocation5 [shape = 'u8[65536]{0}', space=vmem, size = 0x10000, scoped, tag = 'input window, operand 1, single buffered']
    #allocation6 [shape = 's32[1]{0}', space=sflag, size = 0x4, scoped, tag = 'scoped memory for tpu_custom_call.1']
    #allocation7 [shape = 'u8[4096]{0}', space=vmem, size = 0x1000, scoped, tag = 'input window, operand 2, single buffered']
    #allocation8 [shape = 'u8[8192]{0}', space=vmem, size = 0x2000, scoped, tag = 'output window, operand 0, single buffered']
    %8 = vsyncpa [#allocation3], 0
    %9 = vsyncpa [#allocation6], 0
    %10 = vsyncpa [#allocation4], 0
    // Predicated region
    $region2: #{tpu_custom_call.1} parent=1 // pred_check
      _
    $region3: #{tpu_custom_call.1} parent=1 // pred_check_branch
      %12 = sbr.rel (0) target = $region5
    $region4: #{tpu_custom_call.1} parent=1 // pred_region
      %s14 = ssub.s32 256, 256
      %15 = vsyncadd [#allocation3], %s14
      %s16 = sshll.u32 [#allocation2], 4
      %s17 = int_to_ptr.vmem [resolvable:$true] %s16
      %22 = dma.hbm_to_vmem [thread:$0]  %s0, 256, %s17, [#allocation3], 128, 128, 8
    $region5: #{tpu_custom_call.1} parent=1 // pred_fallthru
      _
    // Predicated region
    $region6: #{tpu_custom_call.1} parent=1 // pred_check
      _
    $region7: #{tpu_custom_call.1} parent=1 // pred_check_branch
      %24 = sbr.rel (0) target = $region9
    $region8: #{tpu_custom_call.1} parent=1 // pred_region
      %s26 = ssub.s32 2048, 2048
      %27 = vsyncadd [#allocation6], %s26
      %s28 = sshll.u32 [#allocation5], 4
      %s29 = int_to_ptr.vmem [resolvable:$true] %s28
      %34 = dma.hbm_to_vmem [thread:$0]  %s1, 2048, %s29, [#allocation6], 128, 128, 8
    $region9: #{tpu_custom_call.1} parent=1 // pred_fallthru
      _
    // Predicated region
    $region10: #{tpu_custom_call.1} parent=1 // pred_check
      _
    $region11: #{tpu_custom_call.1} parent=1 // pred_check_branch
      %36 = sbr.rel (0) target = $region13
    $region12: #{tpu_custom_call.1} parent=1 // pred_region
      %s38 = ssub.s32 128, 128
      %39 = vsyncadd [#allocation6], %s38
      %s41 = sshll.u32 [#allocation7], 4
      %s42 = int_to_ptr.vmem [resolvable:$true] %s41
      %44 = dma.hbm_to_vmem [thread:$0]  %s2, 128, %s42, [#allocation6]
    $region13: #{tpu_custom_call.1} parent=1 // pred_fallthru
      _
    // Predicated region
    $region14: #{tpu_custom_call.1} parent=1 // pred_check
      _
    $region15: #{tpu_custom_call.1} parent=1 // pred_check_branch
      %46 = sbr.rel (0) target = $region17
    $region16: #{tpu_custom_call.1} parent=1 // pred_region
      %47 = dma.done [#allocation3], 256
    $region17: #{tpu_custom_call.1} parent=1 // pred_fallthru
      _
    // Predicated region
    $region18: #{tpu_custom_call.1} parent=1 // pred_check
      _
    $region19: #{tpu_custom_call.1} parent=1 // pred_check_branch
      %49 = sbr.rel (0) target = $region21
    $region20: #{tpu_custom_call.1} parent=1 // pred_region
      %50 = dma.done [#allocation6], 2048
    $region21: #{tpu_custom_call.1} parent=1 // pred_fallthru
      _
    // Predicated region
    $region22: #{tpu_custom_call.1} parent=1 // pred_check
      _
    $region23: #{tpu_custom_call.1} parent=1 // pred_check_branch
      %52 = sbr.rel (0) target = $region25
    $region24: #{tpu_custom_call.1} parent=1 // pred_region
      %53 = dma.done [#allocation6], 128
    $region25: #{tpu_custom_call.1} parent=1 // pred_fallthru
      _
    %v54 = vld [vmem:[#allocation2] sm:$0xff]
    %v55 = vld [vmem:[#allocation2 + $0x8] sm:$0xff]
    %v56 = vld [vmem:[#allocation5] sm:$0xff]
    %v57 = vld [vmem:[#allocation5 + $0x8] sm:$0xff]
    %v58 = vld [vmem:[#allocation5 + $0x10] sm:$0xff]
    %v59 = vld [vmem:[#allocation5 + $0x18] sm:$0xff]
    %v60 = vld [vmem:[#allocation5 + $0x20] sm:$0xff]
    %v61 = vld [vmem:[#allocation5 + $0x28] sm:$0xff]
    %v62 = vld [vmem:[#allocation5 + $0x30] sm:$0xff]
    %v63 = vld [vmem:[#allocation5 + $0x38] sm:$0xff]
    %v64 = vld [vmem:[#allocation5 + $0x40] sm:$0xff]
    %v65 = vld [vmem:[#allocation5 + $0x48] sm:$0xff]
    %v66 = vld [vmem:[#allocation5 + $0x50] sm:$0xff]
    %v67 = vld [vmem:[#allocation5 + $0x58] sm:$0xff]
    %v68 = vld [vmem:[#allocation5 + $0x60] sm:$0xff]
    %v69 = vld [vmem:[#allocation5 + $0x68] sm:$0xff]
    %v70 = vld [vmem:[#allocation5 + $0x70] sm:$0xff]
    %v71 = vld [vmem:[#allocation5 + $0x78] sm:$0xff]
    %v72 = vld [vmem:[#allocation7] sm:$0xff]
    %v73 = vlaneseq
    %v74 = vshrl.u32 %v73, 7
    %v75 = vsub.s32 0, %v74
    %v76 = vrot.slane %v72, %v75
    %77 = vmatprep.subr.mxu0 0.0
    %78 = vmatpush1.msra.mxu0 %v56
    %79 = vmatprep.subr.mxu0 0.0
    %80 = vmatpush1.msra.mxu0 %v57
    %81 = vmatprep.subr.mxu0 0.0
    %82 = vmatpush1.msra.mxu0 %v58
    %83 = vmatprep.subr.mxu0 0.0
    %84 = vmatpush1.msra.mxu0 %v59
    %85 = vmatprep.subr.mxu0 0.0
    %86 = vmatpush1.msra.mxu0 %v60
    %87 = vmatprep.subr.mxu0 0.0
    %88 = vmatpush1.msra.mxu0 %v61
    %89 = vmatprep.subr.mxu0 0.0
    %90 = vmatpush1.msra.mxu0 %v62
    %91 = vmatprep.subr.mxu0 0.0
    %92 = vmatpush1.msra.mxu0 %v63
    %93 = vmatprep.subr.mxu0 0.0
    %94 = vmatpush1.msra.mxu0 %v64
    %95 = vmatprep.subr.mxu0 0.0
    %96 = vmatpush1.msra.mxu0 %v65
    %97 = vmatprep.subr.mxu0 0.0
    %98 = vmatpush1.msra.mxu0 %v66
    %99 = vmatprep.subr.mxu0 0.0
    %100 = vmatpush1.msra.mxu0 %v67
    %101 = vmatprep.subr.mxu0 0.0
    %102 = vmatpush1.msra.mxu0 %v68
    %103 = vmatprep.subr.mxu0 0.0
    %104 = vmatpush1.msra.mxu0 %v69
    %105 = vmatprep.subr.mxu0 0.0
    %106 = vmatpush1.msra.mxu0 %v70
    %107 = vmatprep.subr.mxu0 0.0
    %108 = vmatpush1.msra.mxu0 %v71
    %109 = vmatprep.subr.mxu0 0.0
    %110 = vmatpush1.msra.mxu0 0.0
    %111 = vmatprep.subr.mxu0 0.0
    %112 = vmatpush1.msra.mxu0 0.0
    %113 = vmatprep.subr.mxu0 0.0
    %114 = vmatpush1.msra.mxu0 0.0
    %115 = vmatprep.subr.mxu0 0.0
    %116 = vmatpush1.msra.mxu0 0.0
    %117 = vmatprep.subr.mxu0 0.0
    %118 = vmatpush1.msra.mxu0 0.0
    %119 = vmatprep.subr.mxu0 0.0
    %120 = vmatpush1.msra.mxu0 0.0
    %121 = vmatprep.subr.mxu0 0.0
    %122 = vmatpush1.msra.mxu0 0.0
    %123 = vmatprep.subr.mxu0 0.0
    %124 = vmatpush1.msra.mxu0 0.0
    %125 = vmatprep.subr.mxu0 0.0
    %126 = vmatpush1.msra.mxu0 0.0
    %127 = vmatprep.subr.mxu0 0.0
    %128 = vmatpush1.msra.mxu0 0.0
    %129 = vmatprep.subr.mxu0 0.0
    %130 = vmatpush1.msra.mxu0 0.0
    %131 = vmatprep.subr.mxu0 0.0
    %132 = vmatpush1.msra.mxu0 0.0
    %133 = vmatprep.subr.mxu0 0.0
    %134 = vmatpush1.msra.mxu0 0.0
    %135 = vmatprep.subr.mxu0 0.0
    %136 = vmatpush1.msra.mxu0 0.0
    %137 = vmatprep.subr.mxu0 0.0
    %138 = vmatpush1.msra.mxu0 0.0
    %139 = vmatprep.subr.mxu0 0.0
    %140 = vmatpush1.msra.mxu0 0.0
    %141 = vmatprep.mubr.f32.mxu0 0.0
    %142 = vmatmul.mubr.f32.gmra.mrb[0].mxu0 %v54
    %v143 = vpop.f32.mrb[0].mxu0
    %v144 = vadd.f32 %v76, %v143
    %v145 = vpop.f32.mrb[0].mxu0
    %146 = vmatprep.mubr.f32.mxu0 0.0
    %147 = vmatmul.mubr.f32.gmra.mrb[0].mxu0 %v55
    %v148 = vpop.f32.mrb[0].mxu0
    %v149 = vadd.f32 %v76, %v148
    %v150 = vpop.f32.mrb[0].mxu0
    %151 = vdwg.mxu0
    %152 = vst [vmem:[#allocation8] sm:$0xff] %v144
    %153 = vst [vmem:[#allocation8 + $0x8] sm:$0xff] %v149
    // Predicated region
    $region26: #{tpu_custom_call.1} parent=1 // pred_check
      _
    $region27: #{tpu_custom_call.1} parent=1 // pred_check_branch
      %155 = sbr.rel (0) target = $region29
    $region28: #{tpu_custom_call.1} parent=1 // pred_region
      %s157 = ssub.s32 256, 256
      %158 = vsyncadd [#allocation4], %s157
      %s159 = sshll.u32 [#allocation8], 4
      %s160 = int_to_ptr.vmem [resolvable:$true] %s159
      %165 = dma.vmem_to_hbm [thread:$0]  %s160, 256, %s3, [#allocation4], 128, 128, 8
    $region29: #{tpu_custom_call.1} parent=1 // pred_fallthru
      _
    // Predicated region
    $region30: #{tpu_custom_call.1} parent=1 // pred_check
      _
    $region31: #{tpu_custom_call.1} parent=1 // pred_check_branch
      %167 = sbr.rel (0) target = $region33
    $region32: #{tpu_custom_call.1} parent=1 // pred_region
      %168 = dma.done [#allocation4], 256
    $region33: #{tpu_custom_call.1} parent=1 // pred_fallthru
      _
    %169 = vsyncpa [#allocation3], 1
    %170 = vsyncpa [#allocation6], 1
    %171 = vsyncpa [#allocation4], 1

</llo_original>
